<compile_context>
chip_gen: v7x
topology: tpu7x:2x2x1
jax: 0.10.0
libtpu: 0.0.40
codegen_flags: <defaults>
</compile_context>

<pallas_src>
import math

import jax
import jax.numpy as jnp
from jax.experimental import pallas as pl
from jax.experimental.pallas import tpu as pltpu

E = 5            # n_embd (true feature width of the PyTorch module)
H = 4 * E        # MLP hidden width
N_HEAD = 1       # single head => head_dim == E
LN_EPS = 1e-5    # PyTorch nn.LayerNorm default
EP = 128         # lane-padded feature / hidden width used on the MXU
NEG_INF = -1e30  # large finite negative for the additive causal mask

# Weight slab (bf16): 4 pre-transposed, zero-padded 128x128 blocks
#   [  0:128]  wk^T   (E  x E )
#   [128:256]  wp^T   (E  x E )
#   [256:384]  w1^T   (E  x 4E)
#   [384:512]  w2^T   (4E x E )
W_ROWS = 4 * EP
# Vector slab (f32): 8 rows, one per bias / LN parameter vector, zero-padded:
#   bk, bp, g1, be1, g2, be2, b1, b2
V_ROWS = 8


def block_kernel(x_ref, w_ref, vec_ref, mask_ref, o_ref, xs_ref):
    # Widen x from E=5 real lanes to a lane-dense 128-lane slab in VMEM.
    # Padding lanes are exactly zero, and every weight / bias / LN-parameter
    # padding lane is zero too, so all downstream math is inert there.
    # (The scratch is re-zeroed every step so this also holds when the batch
    # axis is sharded across TensorCores.)
    xs_ref[...] = jnp.zeros_like(xs_ref)
    xs_ref[:, :E] = x_ref[...]
    x = xs_ref[...]                                    # (T_pad, EP) f32

    # Static slices of the resident parameter slabs (zero runtime cost).
    wkT = w_ref[0 * EP:1 * EP, :]                      # bf16
    wpT = w_ref[1 * EP:2 * EP, :]
    w1T = w_ref[2 * EP:3 * EP, :]
    w2T = w_ref[3 * EP:4 * EP, :]
    bk  = vec_ref[0:1, :]                              # f32
    bp  = vec_ref[1:2, :]
    g1  = vec_ref[2:3, :]
    be1 = vec_ref[3:4, :]
    g2  = vec_ref[4:5, :]
    be2 = vec_ref[5:6, :]
    b1  = vec_ref[6:7, :]
    b2  = vec_ref[7:8, :]

    lane = jax.lax.broadcasted_iota(jnp.int32, (1, EP), 1)
    lane_valid = lane < E                              # real feature lanes

    def ln(h, g, b):
        # LayerNorm over the first E lanes only; padding lanes of h are zero
        # and g/b are zero-padded, so the result stays zero there.
        mu = jnp.sum(h, axis=-1, keepdims=True) * (1.0 / E)
        diff = jnp.where(lane_valid, h - mu, 0.0)
        var = jnp.sum(diff * diff, axis=-1, keepdims=True) * (1.0 / E)
        return diff * jax.lax.rsqrt(var + LN_EPS) * g + b

    scale = 1.0 / math.sqrt(float(E))                  # head_dim == E (1 head)

    # ---- attention branch: x + proj(softmax(mask(kqv kqv^T / sqrt(E))) kqv)
    h = ln(x, g1, be1)
    kqv = jnp.dot(h.astype(jnp.bfloat16), wkT,
                  preferred_element_type=jnp.float32) + bk       # (T_pad, EP)

    kqv_b = kqv.astype(jnp.bfloat16)
    att = jnp.einsum('qd,kd->qk', kqv_b, kqv_b,
                     preferred_element_type=jnp.float32) * scale
    att = att + mask_ref[...]                          # additive causal mask
    att = att - jnp.max(att, axis=-1, keepdims=True)
    p = jnp.exp(att)                                   # f32 softmax
    p = p / jnp.sum(p, axis=-1, keepdims=True)         # exact normalization

    y = jnp.einsum('qk,kd->qd', p.astype(jnp.bfloat16), kqv_b,
                   preferred_element_type=jnp.float32)
    y = jnp.dot(y.astype(jnp.bfloat16), wpT,
                preferred_element_type=jnp.float32) + bp
    x = x + y

    # ---- MLP branch: x + fc2(relu(fc1(ln2(x)))) ----
    h2 = ln(x, g2, be2)
    m = jnp.dot(h2.astype(jnp.bfloat16), w1T,
                preferred_element_type=jnp.float32) + b1
    m = jnp.maximum(m, 0.0)
    m = jnp.dot(m.astype(jnp.bfloat16), w2T,
                preferred_element_type=jnp.float32) + b2

    out = x + m
    o_ref[...] = out[:, :E].astype(o_ref.dtype)        # drop padding lanes


def pack_params(p):
    """Pre-transpose weights into one bf16 slab + one f32 bias/LN slab."""
    w = jnp.zeros((W_ROWS, EP), jnp.float32)
    w = w.at[0 * EP:0 * EP + E, :E].set(p["wk"].T)
    w = w.at[1 * EP:1 * EP + E, :E].set(p["wp"].T)
    w = w.at[2 * EP:2 * EP + E, :H].set(p["w1"].T)
    w = w.at[3 * EP:3 * EP + H, :E].set(p["w2"].T)
    w = w.astype(jnp.bfloat16)

    v = jnp.zeros((V_ROWS, EP), jnp.float32)
    vecs = [p["bk"], p["bp"], p["g1"], p["be1"],
            p["g2"], p["be2"], p["b1"], p["b2"]]
    for i, vec in enumerate(vecs):
        v = v.at[i, :vec.shape[0]].set(vec)
    return w, v


def block_forward(x, params):
    """x: (B, T, E) float32. params: dict of weights (see init_params)."""
    B, T, e = x.shape
    assert e == E

    # Pad T to a sublane multiple (lane-aligned 128 for long sequences so the
    # score matmul stays MXU-friendly).  Padded key rows are causally masked
    # for every real query row; padded query rows are dropped after the call.
    align = 128 if T >= 128 else 8
    T_pad = ((T + align - 1) // align) * align

    x32 = x.astype(jnp.float32)
    if T_pad != T:
        x32 = jnp.pad(x32, ((0, 0), (0, T_pad - T), (0, 0)))

    w_slab, v_slab = pack_params(params)

    causal = jnp.tril(jnp.ones((T_pad, T_pad), jnp.bool_))
    add_mask = jnp.where(causal, 0.0, NEG_INF).astype(jnp.float32)

    out = pl.pallas_call(
        block_kernel,
        out_shape=jax.ShapeDtypeStruct((B, T_pad, E), jnp.float32),
        grid=(B,),
        in_specs=[
            # per-batch x block (double-buffered by the pipeline)
            pl.BlockSpec((None, T_pad, E), lambda b: (b, 0, 0)),
            # constant index_maps -> DMA'd once, VMEM-resident across steps
            pl.BlockSpec((W_ROWS, EP), lambda b: (0, 0)),
            pl.BlockSpec((V_ROWS, EP), lambda b: (0, 0)),
            pl.BlockSpec((T_pad, T_pad), lambda b: (0, 0)),
        ],
        out_specs=pl.BlockSpec((None, T_pad, E), lambda b: (b, 0, 0)),
        scratch_shapes=[pltpu.VMEM((T_pad, EP), jnp.float32)],
        compiler_params=pltpu.CompilerParams(
            dimension_semantics=("parallel",)),   # both TensorCores on v7x
    )(x32, w_slab, v_slab, add_mask)

    if T_pad != T:
        out = out[:, :T, :]
    return out.astype(x.dtype)


def init_params(key):
    """Deterministic parameter init (shapes match the PyTorch module)."""
    ks = jax.random.split(key, 8)
    u = lambda k, shape, fan_in: jax.random.uniform(
        k, shape, jnp.float32, -1.0 / math.sqrt(fan_in), 1.0 / math.sqrt(fan_in)
    )
    return {
        # CausalSelfAttention.key (only linear used for q, k and v)
        "wk": u(ks[0], (E, E), E), "bk": u(ks[1], (E,), E),
        # CausalSelfAttention.proj
        "wp": u(ks[2], (E, E), E), "bp": u(ks[3], (E,), E),
        # LayerNorms (PyTorch default init: gamma=1, beta=0)
        "g1": jnp.ones((E,), jnp.float32), "be1": jnp.zeros((E,), jnp.float32),
        "g2": jnp.ones((E,), jnp.float32), "be2": jnp.zeros((E,), jnp.float32),
        # MLP
        "w1": u(ks[4], (H, E), E), "b1": u(ks[5], (H,), E),
        "w2": u(ks[6], (E, H), H), "b2": u(ks[7], (E,), H),
    }


def block_forward_ref(x, p, mxu_dtype=jnp.float32):
    """Pure-JAX reference.  mxu_dtype mirrors the kernel's MXU operand dtype
    (f32 accumulation either way)."""
    def mm(a, b):
        return jnp.matmul(a.astype(mxu_dtype), b.astype(mxu_dtype),
                          preferred_element_type=jnp.float32)

    def ln(h, g, b):
        mu = jnp.mean(h, -1, keepdims=True)
        var = jnp.mean((h - mu) ** 2, -1, keepdims=True)
        return (h - mu) * jax.lax.rsqrt(var + LN_EPS) * g + b

    h = ln(x, p["g1"], p["be1"])
    kqv = mm(h, p["wk"].T) + p["bk"]
    att = mm(kqv, jnp.swapaxes(kqv, -1, -2)) / math.sqrt(E)
    T = x.shape[1]
    mask = jnp.tril(jnp.ones((T, T), bool))
    att = jnp.where(mask, att, -jnp.inf)
    att = jax.nn.softmax(att, axis=-1)
    y = mm(att, kqv)
    y = mm(y, p["wp"].T) + p["bp"]
    x = x + y
    h2 = ln(x, p["g2"], p["be2"])
    m = mm(jnp.maximum(mm(h2, p["w1"].T) + p["b1"], 0.0), p["w2"].T) + p["b2"]
    return x + m


if __name__ == "__main__":
    B, T = 2, 8
    key = jax.random.PRNGKey(0)
    kx, kp = jax.random.split(key)
    x = jax.random.normal(kx, (B, T, E), jnp.float32)
    params = init_params(kp)

    out = jax.block_until_ready(block_forward(x, params))
    assert out.shape == (B, T, E)

    # Tight check vs. a same-precision (bf16 MXU operands, f32 accumulation)
    # reference -> validates kernel structure/math exactly.
    ref_mixed = block_forward_ref(x, params, mxu_dtype=jnp.bfloat16)
    err_mixed = float(jnp.max(jnp.abs(out - ref_mixed)))
    assert err_mixed < 2e-3, f"mixed-precision max abs err {err_mixed}"

    # Loose check vs. the full-f32 module semantics -> bounds the bf16
    # operand-rounding drift.
    ref_f32 = block_forward_ref(x, params, mxu_dtype=jnp.float32)
    err_f32 = float(jnp.max(jnp.abs(out - ref_f32)))
    assert err_f32 < 1e-1, f"f32-reference max abs err {err_f32}"

    print("KERNEL_OK")
</pallas_src>

<mosaic_0001>
module attributes {stable_mosaic.version = 11 : i64} {
  func.func @block_kernel(%arg0: i32, %arg1: memref<1x8x5xf32, #tpu.memory_space<vmem>>, %arg2: memref<512x128xbf16, #tpu.memory_space<vmem>>, %arg3: memref<8x128xf32, #tpu.memory_space<vmem>>, %arg4: memref<8x8xf32, #tpu.memory_space<vmem>>, %arg5: memref<1x8x5xf32, #tpu.memory_space<vmem>>, %arg6: memref<8x128xf32, #tpu.memory_space<vmem>>) attributes {dimension_semantics = [#tpu.dimension_semantics<parallel>], iteration_bounds = array<i64: 2>, scalar_prefetch = 0 : i64, scratch_operands = 1 : i64, tpu.core_type = #tpu.core_type<tc>, window_params = [{transform_indices = @transform_0, window_bounds = array<i64: 1, 8, 5>}, {pipeline_mode = #tpu.pipeline_mode<synchronous>, transform_indices = @transform_1, window_bounds = array<i64: 512, 128>}, {pipeline_mode = #tpu.pipeline_mode<synchronous>, transform_indices = @transform_2, window_bounds = array<i64: 8, 128>}, {pipeline_mode = #tpu.pipeline_mode<synchronous>, transform_indices = @transform_3, window_bounds = array<i64: 8, 8>}, {transform_indices = @transform_4, window_bounds = array<i64: 1, 8, 5>}]} {
    %cst = arith.constant 0.000000e+00 : f32
    %0 = vector.broadcast %cst : f32 to vector<8x128xf32>
    %c0 = arith.constant 0 : index
    %c0_0 = arith.constant 0 : index
    %1 = vector.load %arg6[%c0, %c0_0] : memref<8x128xf32, #tpu.memory_space<vmem>>, vector<8x128xf32>
    tpu.vector_store %arg6[%c0, %c0_0], %0 {strides = array<i32>} : memref<8x128xf32, #tpu.memory_space<vmem>>, vector<8x128xf32>,
    %c0_1 = arith.constant 0 : index
    %c0_2 = arith.constant 0 : index
    %c0_3 = arith.constant 0 : index
    %2 = vector.load %arg1[%c0_1, %c0_2, %c0_3] : memref<1x8x5xf32, #tpu.memory_space<vmem>>, vector<1x8x5xf32>
    %3 = vector.shape_cast %2 : vector<1x8x5xf32> to vector<8x5xf32>
    %c0_4 = arith.constant 0 : index
    %c0_5 = arith.constant 0 : index
    %4 = vector.load %arg6[%c0_4, %c0_5] : memref<8x128xf32, #tpu.memory_space<vmem>>, vector<8x5xf32>
    tpu.vector_store %arg6[%c0_4, %c0_5], %3 {strides = array<i32>} : memref<8x128xf32, #tpu.memory_space<vmem>>, vector<8x5xf32>,
    %c0_6 = arith.constant 0 : index
    %c0_7 = arith.constant 0 : index
    %5 = vector.load %arg6[%c0_6, %c0_7] : memref<8x128xf32, #tpu.memory_space<vmem>>, vector<8x128xf32>
    %c0_8 = arith.constant 0 : index
    %c0_9 = arith.constant 0 : index
    %6 = vector.load %arg2[%c0_8, %c0_9] : memref<512x128xbf16, #tpu.memory_space<vmem>>, vector<128x128xbf16>
    %c128 = arith.constant 128 : index
    %c0_10 = arith.constant 0 : index
    %7 = vector.load %arg2[%c128, %c0_10] : memref<512x128xbf16, #tpu.memory_space<vmem>>, vector<128x128xbf16>
    %c256 = arith.constant 256 : index
    %c0_11 = arith.constant 0 : index
    %8 = vector.load %arg2[%c256, %c0_11] : memref<512x128xbf16, #tpu.memory_space<vmem>>, vector<128x128xbf16>
    %c384 = arith.constant 384 : index
    %c0_12 = arith.constant 0 : index
    %9 = vector.load %arg2[%c384, %c0_12] : memref<512x128xbf16, #tpu.memory_space<vmem>>, vector<128x128xbf16>
    %c0_13 = arith.constant 0 : index
    %c0_14 = arith.constant 0 : index
    %10 = vector.load %arg3[%c0_13, %c0_14] : memref<8x128xf32, #tpu.memory_space<vmem>>, vector<1x128xf32>
    %c1 = arith.constant 1 : index
    %c0_15 = arith.constant 0 : index
    %11 = vector.load %arg3[%c1, %c0_15] : memref<8x128xf32, #tpu.memory_space<vmem>>, vector<1x128xf32>
    %c2 = arith.constant 2 : index
    %c0_16 = arith.constant 0 : index
    %12 = vector.load %arg3[%c2, %c0_16] : memref<8x128xf32, #tpu.memory_space<vmem>>, vector<1x128xf32>
    %c3 = arith.constant 3 : index
    %c0_17 = arith.constant 0 : index
    %13 = vector.load %arg3[%c3, %c0_17] : memref<8x128xf32, #tpu.memory_space<vmem>>, vector<1x128xf32>
    %c4 = arith.constant 4 : index
    %c0_18 = arith.constant 0 : index
    %14 = vector.load %arg3[%c4, %c0_18] : memref<8x128xf32, #tpu.memory_space<vmem>>, vector<1x128xf32>
    %c5 = arith.constant 5 : index
    %c0_19 = arith.constant 0 : index
    %15 = vector.load %arg3[%c5, %c0_19] : memref<8x128xf32, #tpu.memory_space<vmem>>, vector<1x128xf32>
    %c6 = arith.constant 6 : index
    %c0_20 = arith.constant 0 : index
    %16 = vector.load %arg3[%c6, %c0_20] : memref<8x128xf32, #tpu.memory_space<vmem>>, vector<1x128xf32>
    %c7 = arith.constant 7 : index
    %c0_21 = arith.constant 0 : index
    %17 = vector.load %arg3[%c7, %c0_21] : memref<8x128xf32, #tpu.memory_space<vmem>>, vector<1x128xf32>
    %18 = tpu.iota {dimensions = array<i32: 1>} : vector<1x128xi32>
    %c5_i32 = arith.constant 5 : i32
    %19 = vector.broadcast %c5_i32 : i32 to vector<1x128xi32>
    %20 = arith.cmpi slt, %18, %19 : vector<1x128xi32>
    %cst_22 = arith.constant dense<0.000000e+00> : vector<8xf32>
    %21 = vector.multi_reduction <add>, %5, %cst_22 [1] : vector<8x128xf32> to vector<8xf32>
    %22 = vector.shape_cast %21 : vector<8xf32> to vector<8x1xf32>
    %cst_23 = arith.constant 2.000000e-01 : f32
    %23 = vector.broadcast %cst_23 : f32 to vector<8x1xf32>
    %24 = arith.mulf %22, %23 : vector<8x1xf32>
    %25 = vector.broadcast %24 : vector<8x1xf32> to vector<8x128xf32>
    %26 = arith.subf %5, %25 : vector<8x128xf32>
    %cst_24 = arith.constant 0.000000e+00 : f32
    %27 = vector.shape_cast %20 : vector<1x128xi1> to vector<1x128xi1>
    %28 = vector.broadcast %27 : vector<1x128xi1> to vector<8x128xi1>
    %29 = vector.broadcast %cst_24 : f32 to vector<8x128xf32>
    %30 = arith.select %28, %26, %29 : vector<8x128xi1>, vector<8x128xf32>
    %31 = arith.mulf %30, %30 : vector<8x128xf32>
    %cst_25 = arith.constant dense<0.000000e+00> : vector<8xf32>
    %32 = vector.multi_reduction <add>, %31, %cst_25 [1] : vector<8x128xf32> to vector<8xf32>
    %33 = vector.shape_cast %32 : vector<8xf32> to vector<8x1xf32>
    %cst_26 = arith.constant 2.000000e-01 : f32
    %34 = vector.broadcast %cst_26 : f32 to vector<8x1xf32>
    %35 = arith.mulf %33, %34 : vector<8x1xf32>
    %cst_27 = arith.constant 9.99999974E-6 : f32
    %36 = vector.broadcast %cst_27 : f32 to vector<8x1xf32>
    %37 = arith.addf %35, %36 : vector<8x1xf32>
    %38 = math.rsqrt %37 : vector<8x1xf32>
    %39 = vector.broadcast %38 : vector<8x1xf32> to vector<8x128xf32>
    %40 = arith.mulf %30, %39 : vector<8x128xf32>
    %41 = vector.broadcast %12 : vector<1x128xf32> to vector<8x128xf32>
    %42 = arith.mulf %40, %41 : vector<8x128xf32>
    %43 = vector.broadcast %13 : vector<1x128xf32> to vector<8x128xf32>
    %44 = arith.addf %42, %43 : vector<8x128xf32>
    %45 = arith.truncf %44 : vector<8x128xf32> to vector<8x128xbf16>
    %cst_28 = arith.constant dense<0.000000e+00> : vector<8x128xf32>
    %46 = tpu.matmul %45, %6, %cst_28 {dimension_numbers = #tpu.dot_dimension_numbers<[1], [0], [0], [1], [0, 0, 1, 1], [], []>} : vector<8x128xbf16>, vector<128x128xbf16>, vector<8x128xf32> -> vector<8x128xf32>
    %47 = vector.broadcast %10 : vector<1x128xf32> to vector<8x128xf32>
    %48 = arith.addf %46, %47 : vector<8x128xf32>
    %49 = arith.truncf %48 : vector<8x128xf32> to vector<8x128xbf16>
    "tpu.trace_start"() <{level = 10 : i32, message = "qd,kd->qk"}> : () -> ()
    %cst_29 = arith.constant dense<0.000000e+00> : vector<8x8xf32>
    %50 = tpu.matmul %49, %49, %cst_29 {dimension_numbers = #tpu.dot_dimension_numbers<[1], [1], [0], [0], [0, 0, 1, 0], [], []>} : vector<8x128xbf16>, vector<8x128xbf16>, vector<8x8xf32> -> vector<8x8xf32>
    "tpu.trace_stop"() : () -> ()
    %cst_30 = arith.constant 0.44721359 : f32
    %51 = vector.broadcast %cst_30 : f32 to vector<8x8xf32>
    %52 = arith.mulf %50, %51 : vector<8x8xf32>
    %c0_31 = arith.constant 0 : index
    %c0_32 = arith.constant 0 : index
    %53 = vector.load %arg4[%c0_31, %c0_32] : memref<8x8xf32, #tpu.memory_space<vmem>>, vector<8x8xf32>
    %54 = arith.addf %52, %53 : vector<8x8xf32>
    %cst_33 = arith.constant dense<0xFF800000> : vector<8xf32>
    %55 = vector.multi_reduction <maximumf>, %54, %cst_33 [1] : vector<8x8xf32> to vector<8xf32>
    %56 = vector.shape_cast %55 : vector<8xf32> to vector<8x1xf32>
    %57 = vector.broadcast %56 : vector<8x1xf32> to vector<8x8xf32>
    %58 = arith.subf %54, %57 : vector<8x8xf32>
    %59 = math.exp %58 : vector<8x8xf32>
    %cst_34 = arith.constant dense<0.000000e+00> : vector<8xf32>
    %60 = vector.multi_reduction <add>, %59, %cst_34 [1] : vector<8x8xf32> to vector<8xf32>
    %61 = vector.shape_cast %60 : vector<8xf32> to vector<8x1xf32>
    %62 = vector.broadcast %61 : vector<8x1xf32> to vector<8x8xf32>
    %63 = arith.divf %59, %62 : vector<8x8xf32>
    %64 = arith.truncf %63 : vector<8x8xf32> to vector<8x8xbf16>
    "tpu.trace_start"() <{level = 10 : i32, message = "qk,kd->qd"}> : () -> ()
    %cst_35 = arith.constant dense<0.000000e+00> : vector<8x128xf32>
    %65 = tpu.matmul %64, %49, %cst_35 {dimension_numbers = #tpu.dot_dimension_numbers<[1], [0], [0], [1], [0, 0, 1, 1], [], []>} : vector<8x8xbf16>, vector<8x128xbf16>, vector<8x128xf32> -> vector<8x128xf32>
    "tpu.trace_stop"() : () -> ()
    %66 = arith.truncf %65 : vector<8x128xf32> to vector<8x128xbf16>
    %cst_36 = arith.constant dense<0.000000e+00> : vector<8x128xf32>
    %67 = tpu.matmul %66, %7, %cst_36 {dimension_numbers = #tpu.dot_dimension_numbers<[1], [0], [0], [1], [0, 0, 1, 1], [], []>} : vector<8x128xbf16>, vector<128x128xbf16>, vector<8x128xf32> -> vector<8x128xf32>
    %68 = vector.broadcast %11 : vector<1x128xf32> to vector<8x128xf32>
    %69 = arith.addf %67, %68 : vector<8x128xf32>
    %70 = arith.addf %5, %69 : vector<8x128xf32>
    %cst_37 = arith.constant dense<0.000000e+00> : vector<8xf32>
    %71 = vector.multi_reduction <add>, %70, %cst_37 [1] : vector<8x128xf32> to vector<8xf32>
    %72 = vector.shape_cast %71 : vector<8xf32> to vector<8x1xf32>
    %cst_38 = arith.constant 2.000000e-01 : f32
    %73 = vector.broadcast %cst_38 : f32 to vector<8x1xf32>
    %74 = arith.mulf %72, %73 : vector<8x1xf32>
    %75 = vector.broadcast %74 : vector<8x1xf32> to vector<8x128xf32>
    %76 = arith.subf %70, %75 : vector<8x128xf32>
    %cst_39 = arith.constant 0.000000e+00 : f32
    %77 = vector.shape_cast %20 : vector<1x128xi1> to vector<1x128xi1>
    %78 = vector.broadcast %77 : vector<1x128xi1> to vector<8x128xi1>
    %79 = vector.broadcast %cst_39 : f32 to vector<8x128xf32>
    %80 = arith.select %78, %76, %79 : vector<8x128xi1>, vector<8x128xf32>
    %81 = arith.mulf %80, %80 : vector<8x128xf32>
    %cst_40 = arith.constant dense<0.000000e+00> : vector<8xf32>
    %82 = vector.multi_reduction <add>, %81, %cst_40 [1] : vector<8x128xf32> to vector<8xf32>
    %83 = vector.shape_cast %82 : vector<8xf32> to vector<8x1xf32>
    %cst_41 = arith.constant 2.000000e-01 : f32
    %84 = vector.broadcast %cst_41 : f32 to vector<8x1xf32>
    %85 = arith.mulf %83, %84 : vector<8x1xf32>
    %cst_42 = arith.constant 9.99999974E-6 : f32
    %86 = vector.broadcast %cst_42 : f32 to vector<8x1xf32>
    %87 = arith.addf %85, %86 : vector<8x1xf32>
    %88 = math.rsqrt %87 : vector<8x1xf32>
    %89 = vector.broadcast %88 : vector<8x1xf32> to vector<8x128xf32>
    %90 = arith.mulf %80, %89 : vector<8x128xf32>
    %91 = vector.broadcast %14 : vector<1x128xf32> to vector<8x128xf32>
    %92 = arith.mulf %90, %91 : vector<8x128xf32>
    %93 = vector.broadcast %15 : vector<1x128xf32> to vector<8x128xf32>
    %94 = arith.addf %92, %93 : vector<8x128xf32>
    %95 = arith.truncf %94 : vector<8x128xf32> to vector<8x128xbf16>
    %cst_43 = arith.constant dense<0.000000e+00> : vector<8x128xf32>
    %96 = tpu.matmul %95, %8, %cst_43 {dimension_numbers = #tpu.dot_dimension_numbers<[1], [0], [0], [1], [0, 0, 1, 1], [], []>} : vector<8x128xbf16>, vector<128x128xbf16>, vector<8x128xf32> -> vector<8x128xf32>
    %97 = vector.broadcast %16 : vector<1x128xf32> to vector<8x128xf32>
    %98 = arith.addf %96, %97 : vector<8x128xf32>
    %cst_44 = arith.constant 0.000000e+00 : f32
    %99 = vector.broadcast %cst_44 : f32 to vector<8x128xf32>
    %100 = arith.maximumf %98, %99 : vector<8x128xf32>
    %101 = arith.truncf %100 : vector<8x128xf32> to vector<8x128xbf16>
    %cst_45 = arith.constant dense<0.000000e+00> : vector<8x128xf32>
    %102 = tpu.matmul %101, %9, %cst_45 {dimension_numbers = #tpu.dot_dimension_numbers<[1], [0], [0], [1], [0, 0, 1, 1], [], []>} : vector<8x128xbf16>, vector<128x128xbf16>, vector<8x128xf32> -> vector<8x128xf32>
    %103 = vector.broadcast %17 : vector<1x128xf32> to vector<8x128xf32>
    %104 = arith.addf %102, %103 : vector<8x128xf32>
    %105 = arith.addf %70, %104 : vector<8x128xf32>
    %106 = vector.extract_strided_slice %105 {offsets = [0, 0], sizes = [8, 5], strides = [1, 1]} : vector<8x128xf32> to vector<8x5xf32>
    %c0_46 = arith.constant 0 : index
    %c0_47 = arith.constant 0 : index
    %c0_48 = arith.constant 0 : index
    %107 = vector.load %arg5[%c0_46, %c0_47, %c0_48] : memref<1x8x5xf32, #tpu.memory_space<vmem>>, vector<1x8x5xf32>
    %108 = vector.shape_cast %107 : vector<1x8x5xf32> to vector<8x5xf32>
    %109 = vector.shape_cast %106 : vector<8x5xf32> to vector<1x8x5xf32>
    tpu.vector_store %arg5[%c0_46, %c0_47, %c0_48], %109 {strides = array<i32>} : memref<1x8x5xf32, #tpu.memory_space<vmem>>, vector<1x8x5xf32>,
    return
  }
  func.func @transform_0(%arg0: i32) -> (i32, i32, i32) {
    %c0_i32 = arith.constant 0 : i32
    %c0_i32_0 = arith.constant 0 : i32
    %c0_i32_1 = arith.constant 0 : i32
    return %arg0, %c0_i32, %c0_i32_0 : i32, i32, i32
  }
  func.func @transform_1(%arg0: i32) -> (i32, i32) {
    %c0_i32 = arith.constant 0 : i32
    %c0_i32_0 = arith.constant 0 : i32
    %c0_i32_1 = arith.constant 0 : i32
    return %c0_i32, %c0_i32_0 : i32, i32
  }
  func.func @transform_2(%arg0: i32) -> (i32, i32) {
    %c0_i32 = arith.constant 0 : i32
    %c0_i32_0 = arith.constant 0 : i32
    %c0_i32_1 = arith.constant 0 : i32
    return %c0_i32, %c0_i32_0 : i32, i32
  }
  func.func @transform_3(%arg0: i32) -> (i32, i32) {
    %c0_i32 = arith.constant 0 : i32
    %c0_i32_0 = arith.constant 0 : i32
    %c0_i32_1 = arith.constant 0 : i32
    return %c0_i32, %c0_i32_0 : i32, i32
  }
  func.func @transform_4(%arg0: i32) -> (i32, i32, i32) {
    %c0_i32 = arith.constant 0 : i32
    %c0_i32_0 = arith.constant 0 : i32
    %c0_i32_1 = arith.constant 0 : i32
    return %arg0, %c0_i32, %c0_i32_0 : i32, i32, i32
  }
}

</mosaic_0001>

<llo_original>
// kernel: tpu_custom_call.1
$region0: #{tpu_custom_call.1}
  #allocation0 [shape = 'u32[]', space=smem, size = 0x4, offset = 0x4, fixed_abs, tag = 'smem constant byte address 0x4 - core index']
  #allocation1 [shape = 'u32[144,128]{1,0:T(1,128)}', space=vmem, size = 0x12000, scoped, tag = 'internal scratch']
  #allocation2 [shape = 'f32[8,128]{1,0:T(8,128)}', space=vmem, size = 0x1000, scoped, tag = 'scratch operand']
  %s0 = inlined_call_operand.vmem [shape: f32[2,8,5], index: 0, kind: input, shape index: {}]
  %s1 = inlined_call_operand.hbm [shape: bf16[512,128], index: 1, kind: input, shape index: {}]
  %s2 = inlined_call_operand.vmem [shape: f32[8,128], index: 2, kind: input, shape index: {}]
  %s3 = inlined_call_operand.vmem [shape: f32[8,8], index: 3, kind: input, shape index: {}]
  %s4 = inlined_call_operand.vmem [shape: f32[2,8,5], index: 4, kind: output, shape index: {}]
  %s5 = sld [smem:[#allocation0]]
  $region53: #{tpu_custom_call.1} parent=0
    _
  %s7 = ssub.s32 1, %s5
  %s8 = scalar_select 0, %s7, %s5
  $region1: #{tpu_custom_call.1} parent=0
    #allocation3 [shape = 'u8[131072]{0}', space=vmem, size = 0x20000, scoped, tag = 'input window, operand 1, single buffered']
    #allocation4 [shape = 's32[2]{0}', space=sflag, size = 0x8, scoped, tag = 'scoped memory for tpu_custom_call.1']
    %9 = vsyncpa [#allocation4], 0
    loop: start=0, step=1, limit=4
    $region2: #{tpu_custom_call.1} parent=1 // loop_pre_header
      _
    $region3: #{tpu_custom_call.1} parent=1 // loop_header
      %s11 = sphi 0, %s15
      %p12 = scmp.ge.s32.totalorder %s11, 4
      %s21 = sphi 0, %s23
      %s24 = sphi 0, %s21
      %s25 = sphi 0, %s24
      %s41 = sphi 0, %s25
      %s45 = sphi 0, %s45
      %s47 = sphi 0, %s45
      %s48 = sphi 0, %s47
      %s62 = sphi 0, %s48
      %s66 = sphi 0, %s66
      %s68 = sphi 0, %s66
      %s69 = sphi 0, %s68
      %s83 = sphi 0, %s69
      %s87 = sphi 0, %s87
      %s89 = sphi 0, %s87
      %s90 = sphi 0, %s89
      %s104 = sphi 0, %s90
      %s110 = sphi 0, %s112
      %s113 = sphi 0, %s110
      %s114 = sphi 0, %s113
      %s130 = sphi 0, %s114
    $region4: #{tpu_custom_call.1} parent=1 // loop_header_branch
      %14 = sbr.rel (%p12) target = $region8
    $region5: #{tpu_custom_call.1} parent=1 // loop_body
      %s16 = ssub.s32 %s11, 1
      %s17 = ssub.s32 %s11, 2
      %s18 = sadd.s32 %s11, 1
      %s19 = ssub.s32 %s11, %s18
      %p20 = scmp.eq.s32.totalorder %s19, 0
      %s22 = sadd.s32 %s21, 1
      %s23 = scalar_select %p20, %s21, %s22
      %p26 = pneg %p20
      %p27 = scmp.eq.s32.totalorder %s11, 1
      %p28 = por %p26, %p27
      %p29 = scmp.ne.s32.totalorder %s21, %s24
      %p30 = scmp.eq.s32.totalorder %s11, 0
      %p31 = por %p29, %p30
      %p32 = scmp.ne.s32.totalorder %s21, %s24
      %p33 = scmp.eq.s32.totalorder %s16, 1
      %p34 = por %p32, %p33
      %p35 = scmp.ne.s32.totalorder %s24, %s25
      %p36 = scmp.eq.s32.totalorder %s16, 0
      %p37 = por %p35, %p36
      %p38 = scmp.ne.s32.totalorder %s24, %s25
      %p39 = scmp.eq.s32.totalorder %s17, 1
      %p40 = por %p38, %p39
      %p42 = scmp.ne.s32.totalorder %s25, %s41
      %p43 = scmp.eq.s32.totalorder %s17, 0
      %p44 = por %p42, %p43
      %s46 = sadd.s32 %s45, 1
      %p49 = scmp.eq.s32.totalorder %s11, 1
      %p50 = scmp.ne.s32.totalorder %s45, %s47
      %p51 = scmp.eq.s32.totalorder %s11, 0
      %p52 = por %p50, %p51
      %p53 = scmp.ne.s32.totalorder %s45, %s47
      %p54 = scmp.eq.s32.totalorder %s16, 1
      %p55 = por %p53, %p54
      %p56 = scmp.ne.s32.totalorder %s47, %s48
      %p57 = scmp.eq.s32.totalorder %s16, 0
      %p58 = por %p56, %p57
      %p59 = scmp.ne.s32.totalorder %s47, %s48
      %p60 = scmp.eq.s32.totalorder %s17, 1
      %p61 = por %p59, %p60
      %p63 = scmp.ne.s32.totalorder %s48, %s62
      %p64 = scmp.eq.s32.totalorder %s17, 0
      %p65 = por %p63, %p64
      %s67 = sadd.s32 %s66, 1
      %p70 = scmp.eq.s32.totalorder %s11, 1
      %p71 = scmp.ne.s32.totalorder %s66, %s68
      %p72 = scmp.eq.s32.totalorder %s11, 0
      %p73 = por %p71, %p72
      %p74 = scmp.ne.s32.totalorder %s66, %s68
      %p75 = scmp.eq.s32.totalorder %s16, 1
      %p76 = por %p74, %p75
      %p77 = scmp.ne.s32.totalorder %s68, %s69
      %p78 = scmp.eq.s32.totalorder %s16, 0
      %p79 = por %p77, %p78
      %p80 = scmp.ne.s32.totalorder %s68, %s69
      %p81 = scmp.eq.s32.totalorder %s17, 1
      %p82 = por %p80, %p81
      %p84 = scmp.ne.s32.totalorder %s69, %s83
      %p85 = scmp.eq.s32.totalorder %s17, 0
      %p86 = por %p84, %p85
      %s88 = sadd.s32 %s87, 1
      %p91 = scmp.eq.s32.totalorder %s11, 1
      %p92 = scmp.ne.s32.totalorder %s87, %s89
      %p93 = scmp.eq.s32.totalorder %s11, 0
      %p94 = por %p92, %p93
      %p95 = scmp.ne.s32.totalorder %s87, %s89
      %p96 = scmp.eq.s32.totalorder %s16, 1
      %p97 = por %p95, %p96
      %p98 = scmp.ne.s32.totalorder %s89, %s90
      %p99 = scmp.eq.s32.totalorder %s16, 0
      %p100 = por %p98, %p99
      %p101 = scmp.ne.s32.totalorder %s89, %s90
      %p102 = scmp.eq.s32.totalorder %s17, 1
      %p103 = por %p101, %p102
      %p105 = scmp.ne.s32.totalorder %s90, %s104
      %p106 = scmp.eq.s32.totalorder %s17, 0
      %p107 = por %p105, %p106
      %s108 = ssub.s32 %s11, %s18
      %p109 = scmp.eq.s32.totalorder %s108, 0
      %s111 = sadd.s32 %s110, 1
      %s112 = scalar_select %p109, %s110, %s111
      %p115 = pneg %p109
      %p116 = scmp.eq.s32.totalorder %s11, 1
      %p117 = por %p115, %p116
      %p118 = scmp.ne.s32.totalorder %s110, %s113
      %p119 = scmp.eq.s32.totalorder %s11, 0
      %p120 = por %p118, %p119
      %p121 = scmp.ne.s32.totalorder %s110, %s113
      %p122 = scmp.eq.s32.totalorder %s16, 1
      %p123 = por %p121, %p122
      %p124 = scmp.ne.s32.totalorder %s113, %s114
      %p125 = scmp.eq.s32.totalorder %s16, 0
      %p126 = por %p124, %p125
      %p127 = scmp.ne.s32.totalorder %s113, %s114
      %p128 = scmp.eq.s32.totalorder %s17, 1
      %p129 = por %p127, %p128
      %p131 = scmp.ne.s32.totalorder %s114, %s130
      %p132 = scmp.eq.s32.totalorder %s17, 0
      %p133 = por %p131, %p132
      %p134 = scmp.le.s32.totalorder 1, %s11
      %p135 = scmp.lt.s32.totalorder %s11, 3
      %p136 = pnand %p134, %p135
      %p137 = pneg %p136
      // Predicated region
      $region9: #{tpu_custom_call.1} parent=5 // pred_check
        _
      $region10: #{tpu_custom_call.1} parent=5 // pred_check_branch
        %139 = sbr.rel (%p136) target = $region12
      $region11: #{tpu_custom_call.1} parent=5 // pred_region
        %s140 = ssub.s32 %s11, 1
        // Predicated region
        $region13: #{tpu_custom_call.1} parent=11 // pred_check
          %p141 = pneg %p58
        $region14: #{tpu_custom_call.1} parent=11 // pred_check_branch
          %143 = sbr.rel (%p141) target = $region16
        $region15: #{tpu_custom_call.1} parent=11 // pred_region
          %s145 = ssub.s32 4096, 4096
          %146 = vsyncadd [#allocation4], %s145
          %s147 = sshll.u32 [#allocation3], 4
          %s148 = int_to_ptr.vmem [resolvable:$true] %s147
          %153 = dma.hbm_to_vmem [thread:$0]  %s1, 4096, %s148, [#allocation4], 64, 64, 4
        $region16: #{tpu_custom_call.1} parent=11 // pred_fallthru
          _
        // Predicated region
        $region17: #{tpu_custom_call.1} parent=11 // pred_check
          %p154 = pneg %p79
        $region18: #{tpu_custom_call.1} parent=11 // pred_check_branch
          %156 = sbr.rel (%p154) target = $region20
        $region19: #{tpu_custom_call.1} parent=11 // pred_region
          _
        $region20: #{tpu_custom_call.1} parent=11 // pred_fallthru
          _
        // Predicated region
        $region21: #{tpu_custom_call.1} parent=11 // pred_check
          %p157 = pneg %p100
        $region22: #{tpu_custom_call.1} parent=11 // pred_check_branch
          %159 = sbr.rel (%p157) target = $region24
        $region23: #{tpu_custom_call.1} parent=11 // pred_region
          _
        $region24: #{tpu_custom_call.1} parent=11 // pred_fallthru
          _
      $region12: #{tpu_custom_call.1} parent=5 // pred_fallthru
        _
      %p160 = scmp.lt.s32.totalorder %s11, 2
      // Predicated region
      $region25: #{tpu_custom_call.1} parent=5 // pred_check
        %p161 = pneg %p160
      $region26: #{tpu_custom_call.1} parent=5 // pred_check_branch
        %163 = sbr.rel (%p161) target = $region28
      $region27: #{tpu_custom_call.1} parent=5 // pred_region
        // Predicated region
        $region29: #{tpu_custom_call.1} parent=27 // pred_check
          %p164 = pneg %p31
        $region30: #{tpu_custom_call.1} parent=27 // pred_check_branch
          %166 = sbr.rel (%p164) target = $region32
        $region31: #{tpu_custom_call.1} parent=27 // pred_region
          %p167 = scmp.lt.s32.totalorder %s11, 1
          %s168 = scalar_select %p167, %s11, 1
          %s169 = smul.addr %s168, 8
          %s170 = scalar_lea.vmem %s0, %s169
        $region32: #{tpu_custom_call.1} parent=27 // pred_fallthru
          _
      $region28: #{tpu_custom_call.1} parent=5 // pred_fallthru
        _
      %p171 = scmp.le.s32.totalorder 1, %s11
      %p172 = scmp.lt.s32.totalorder %s11, 3
      %p173 = pnand %p171, %p172
      %p174 = pneg %p173
      // Predicated region
      $region33: #{tpu_custom_call.1} parent=5 // pred_check
        _
      $region34: #{tpu_custom_call.1} parent=5 // pred_check_branch
        %176 = sbr.rel (%p173) target = $region36
      $region35: #{tpu_custom_call.1} parent=5 // pred_region
        %s177 = ssub.s32 %s11, 1
        // Predicated region
        $region37: #{tpu_custom_call.1} parent=35 // pred_check
          %p178 = pneg %p58
        $region38: #{tpu_custom_call.1} parent=35 // pred_check_branch
          %180 = sbr.rel (%p178) target = $region40
        $region39: #{tpu_custom_call.1} parent=35 // pred_region
          %181 = dma.done [#allocation4], 4096
        $region40: #{tpu_custom_call.1} parent=35 // pred_fallthru
          _
        %p182 = scmp.lt.s32.totalorder %s16, 1
        %s183 = scalar_select %p182, %s16, 1
        %s184 = smul.addr %s183, 8
        %s185 = scalar_lea.vmem %s0, %s184
        %p186 = pneg %p37
        %p187 = pneg %p34
        %p188 = pneg %p58
        %p189 = pneg %p55
        %p190 = pneg %p79
        %p191 = pneg %p76
        %p192 = pneg %p100
        %p193 = pneg %p97
        %p194 = pneg %p126
        %p195 = pneg %p123
        %p196 = scmp.lt.s32.totalorder %s16, 1
        %s197 = scalar_select %p196, %s16, 1
        %s198 = smul.addr %s197, 8
        %s199 = scalar_lea.vmem %s4, %s198
        %p200 = scmp.lt.s32.totalorder %s16, 1
        %s201 = scalar_select %p200, %s16, 1
        %s202 = smul.addr %s201, 8
        %s203 = scalar_lea.vmem %s0, %s202
        %p204 = scmp.lt.s32.totalorder %s16, 1
        %s205 = scalar_select %p204, %s16, 1
        %s206 = smul.addr %s205, 8
        %s207 = scalar_lea.vmem %s4, %s206
        %209 = vst [vmem:[#allocation2] sm:$0xff] 0.0
        %v210 = vld [vmem:[%s203] sm:$0xff]
        %vm211 = vcmask 39936
        %212 = vst.msk [vmem:[#allocation2] sm:$0xff] %vm211, %v210
        %v213 = vld [vmem:[#allocation2] sm:$0xff]
        %v214 = vld [vmem:[#allocation3] sm:$0xf]
        %v215 = vld [vmem:[#allocation3 + $0x4] sm:$0xf]
        %v216 = vld [vmem:[#allocation3 + $0x8] sm:$0xf]
        %v217 = vld [vmem:[#allocation3 + $0xc] sm:$0xf]
        %v218 = vld [vmem:[#allocation3 + $0x10] sm:$0xf]
        %v219 = vld [vmem:[#allocation3 + $0x14] sm:$0xf]
        %v220 = vld [vmem:[#allocation3 + $0x18] sm:$0xf]
        %v221 = vld [vmem:[#allocation3 + $0x1c] sm:$0xf]
        %v222 = vld [vmem:[#allocation3 + $0x20] sm:$0xf]
        %v223 = vld [vmem:[#allocation3 + $0x24] sm:$0xf]
        %v224 = vld [vmem:[#allocation3 + $0x28] sm:$0xf]
        %v225 = vld [vmem:[#allocation3 + $0x2c] sm:$0xf]
        %v226 = vld [vmem:[#allocation3 + $0x30] sm:$0xf]
        %v227 = vld [vmem:[#allocation3 + $0x34] sm:$0xf]
        %v228 = vld [vmem:[#allocation3 + $0x38] sm:$0xf]
        %v229 = vld [vmem:[#allocation3 + $0x3c] sm:$0xf]
        %v230 = vld [vmem:[#allocation3 + $0x40] sm:$0xf]
        %v231 = vld [vmem:[#allocation3 + $0x44] sm:$0xf]
        %v232 = vld [vmem:[#allocation3 + $0x48] sm:$0xf]
        %v233 = vld [vmem:[#allocation3 + $0x4c] sm:$0xf]
        %v234 = vld [vmem:[#allocation3 + $0x50] sm:$0xf]
        %v235 = vld [vmem:[#allocation3 + $0x54] sm:$0xf]
        %v236 = vld [vmem:[#allocation3 + $0x58] sm:$0xf]
        %v237 = vld [vmem:[#allocation3 + $0x5c] sm:$0xf]
        %v238 = vld [vmem:[#allocation3 + $0x60] sm:$0xf]
        %v239 = vld [vmem:[#allocation3 + $0x64] sm:$0xf]
        %v240 = vld [vmem:[#allocation3 + $0x68] sm:$0xf]
        %v241 = vld [vmem:[#allocation3 + $0x6c] sm:$0xf]
        %v242 = vld [vmem:[#allocation3 + $0x70] sm:$0xf]
        %v243 = vld [vmem:[#allocation3 + $0x74] sm:$0xf]
        %v244 = vld [vmem:[#allocation3 + $0x78] sm:$0xf]
        %v245 = vld [vmem:[#allocation3 + $0x7c] sm:$0xf]
        %v246 = vld [vmem:[#allocation3 + $0x80] sm:$0xf]
        %v247 = vld [vmem:[#allocation3 + $0x84] sm:$0xf]
        %v248 = vld [vmem:[#allocation3 + $0x88] sm:$0xf]
        %v249 = vld [vmem:[#allocation3 + $0x8c] sm:$0xf]
        %v250 = vld [vmem:[#allocation3 + $0x90] sm:$0xf]
        %v251 = vld [vmem:[#allocation3 + $0x94] sm:$0xf]
        %v252 = vld [vmem:[#allocation3 + $0x98] sm:$0xf]
        %v253 = vld [vmem:[#allocation3 + $0x9c] sm:$0xf]
        %v254 = vld [vmem:[#allocation3 + $0xa0] sm:$0xf]
        %v255 = vld [vmem:[#allocation3 + $0xa4] sm:$0xf]
        %v256 = vld [vmem:[#allocation3 + $0xa8] sm:$0xf]
        %v257 = vld [vmem:[#allocation3 + $0xac] sm:$0xf]
        %v258 = vld [vmem:[#allocation3 + $0xb0] sm:$0xf]
        %v259 = vld [vmem:[#allocation3 + $0xb4] sm:$0xf]
        %v260 = vld [vmem:[#allocation3 + $0xb8] sm:$0xf]
        %v261 = vld [vmem:[#allocation3 + $0xbc] sm:$0xf]
        %v262 = vld [vmem:[#allocation3 + $0xc0] sm:$0xf]
        %v263 = vld [vmem:[#allocation3 + $0xc4] sm:$0xf]
        %v264 = vld [vmem:[#allocation3 + $0xc8] sm:$0xf]
        %v265 = vld [vmem:[#allocation3 + $0xcc] sm:$0xf]
        %v266 = vld [vmem:[#allocation3 + $0xd0] sm:$0xf]
        %v267 = vld [vmem:[#allocation3 + $0xd4] sm:$0xf]
        %v268 = vld [vmem:[#allocation3 + $0xd8] sm:$0xf]
        %v269 = vld [vmem:[#allocation3 + $0xdc] sm:$0xf]
        %v270 = vld [vmem:[#allocation3 + $0xe0] sm:$0xf]
        %v271 = vld [vmem:[#allocation3 + $0xe4] sm:$0xf]
        %v272 = vld [vmem:[#allocation3 + $0xe8] sm:$0xf]
        %v273 = vld [vmem:[#allocation3 + $0xec] sm:$0xf]
        %v274 = vld [vmem:[#allocation3 + $0xf0] sm:$0xf]
        %v275 = vld [vmem:[#allocation3 + $0xf4] sm:$0xf]
        %v276 = vld [vmem:[#allocation3 + $0xf8] sm:$0xf]
        %v277 = vld [vmem:[#allocation3 + $0xfc] sm:$0xf]
        %v278 = vld [vmem:[%s2] sm:$0x1]
        %v279 = vld [vmem:[%s2 + $0x1] sm:$0x1]
        %v280 = vld [vmem:[%s2 + $0x2] sm:$0x1]
        %v281 = vld [vmem:[%s2 + $0x3] sm:$0x1]
        %v282 = vld [vmem:[%s2 + $0x4] sm:$0x1]
        %v283 = vld [vmem:[%s2 + $0x5] sm:$0x1]
        %v284 = vld [vmem:[%s2 + $0x6] sm:$0x1]
        %v285 = vld [vmem:[%s2 + $0x7] sm:$0x1]
        %v286 = vlaneseq
        %v287 = vand.u32 %v286, 127
        %vm288 = vcmp.lt.s32.totalorder %v287, 5
        %289 = vadd.xlane.f32.xlu0 %v213
        %v290 = vpop.xlane.xlu0 %289
        %v291 = vmul.f32 %v290, 0.2
        %v292 = vsub.f32 %v213, %v291
        %v293 = vsel %vm288, 1, 0
        %vm294 = vcmp.eq.s32.totalorder %v293, 1
        %v295 = vsel %vm294, %v292, 0.0
        %v296 = vmul.f32 %v295, %v295
        %297 = vadd.xlane.f32.xlu0 %v296
        %v298 = vpop.xlane.xlu0 %297
        %v299 = vmul.f32 %v298, 0.2
        %v300 = vadd.f32 %v299, 1e-05
        %v301 = vrsqrt.pop %v300
        %v302 = vmul.f32 %v295, %v301
        %v303 = vlaneseq
        %v304 = vshrl.u32 %v303, 7
        %v305 = vsub.s32 0, %v304
        %v306 = vrot.slane %v280, %v305
        %v307 = vmul.f32 %v302, %v306
        %v308 = vlaneseq
        %v309 = vshrl.u32 %v308, 7
        %v310 = vsub.s32 0, %v309
        %v311 = vrot.slane %v281, %v310
        %v312 = vadd.f32 %v307, %v311
        %v313 = vpack.c.bf16 %v312, %v312
        %v314 = vlaneseq
        %v315 = vshrl.u32 %v314, 7
        %v316 = vsub.s32 0, %v315
        %v317 = vrot.slane %v278, %v316
        %v334 = vunpack.c.l.b16 %v214
        %v335 = vunpack.c.l.b16 %v215
        %v336 = vunpack.c.l.b16 %v216
        %v337 = vunpack.c.l.b16 %v217
        %v338 = vunpack.c.l.b16 %v218
        %v339 = vunpack.c.l.b16 %v219
        %v340 = vunpack.c.l.b16 %v220
        %v341 = vunpack.c.l.b16 %v221
        %v342 = vunpack.c.l.b16 %v222
        %v343 = vunpack.c.l.b16 %v223
        %v344 = vunpack.c.l.b16 %v224
        %v345 = vunpack.c.l.b16 %v225
        %v346 = vunpack.c.l.b16 %v226
        %v347 = vunpack.c.l.b16 %v227
        %v348 = vunpack.c.l.b16 %v228
        %v349 = vunpack.c.l.b16 %v229
        %v350 = vpack.c.b16 %v335, %v334
        %v351 = vpack.c.b16 %v337, %v336
        %v352 = vpack.c.b16 %v339, %v338
        %v353 = vpack.c.b16 %v341, %v340
        %v354 = vpack.c.b16 %v343, %v342
        %v355 = vpack.c.b16 %v345, %v344
        %v356 = vpack.c.b16 %v347, %v346
        %v357 = vpack.c.b16 %v349, %v348
        %366 = vmatprep.subr.bf16.mxu0 0
        %367 = vmatpush1.bf16.msra.mxu0 %v350
        %368 = vmatprep.subr.bf16.mxu0 0
        %369 = vmatpush1.bf16.msra.mxu0 %v351
        %370 = vmatprep.subr.bf16.mxu0 0
        %371 = vmatpush1.bf16.msra.mxu0 %v352
        %372 = vmatprep.subr.bf16.mxu0 0
        %373 = vmatpush1.bf16.msra.mxu0 %v353
        %374 = vmatprep.subr.bf16.mxu0 0
        %375 = vmatpush1.bf16.msra.mxu0 %v354
        %376 = vmatprep.subr.bf16.mxu0 0
        %377 = vmatpush1.bf16.msra.mxu0 %v355
        %378 = vmatprep.subr.bf16.mxu0 0
        %379 = vmatpush1.bf16.msra.mxu0 %v356
        %380 = vmatprep.subr.bf16.mxu0 0
        %381 = vmatpush1.bf16.msra.mxu0 %v357
        %382 = vmatprep.subr.bf16.mxu0 0
        %383 = vmatpush1.bf16.msra.mxu0 0
        %384 = vmatprep.subr.bf16.mxu0 0
        %385 = vmatpush1.bf16.msra.mxu0 0
        %386 = vmatprep.subr.bf16.mxu0 0
        %387 = vmatpush1.bf16.msra.mxu0 0
        %388 = vmatprep.subr.bf16.mxu0 0
        %389 = vmatpush1.bf16.msra.mxu0 0
        %390 = vmatprep.subr.bf16.mxu0 0
        %391 = vmatpush1.bf16.msra.mxu0 0
        %392 = vmatprep.subr.bf16.mxu0 0
        %393 = vmatpush1.bf16.msra.mxu0 0
        %394 = vmatprep.subr.bf16.mxu0 0
        %395 = vmatpush1.bf16.msra.mxu0 0
        %396 = vmatprep.subr.bf16.mxu0 0
        %397 = vmatpush1.bf16.msra.mxu0 0
        %398 = vmatprep.mubr.bf16.mxu0 0
        %399 = vmatmul.mubr.bf16.gmra.mrb[0].mxu0 %v313
        %v400 = vpop.f32.mrb[0].mxu0
        %v401 = vadd.f32 %v317, %v400
        %v402 = vpop.f32.mrb[0].mxu0
        %v403 = vpop.f32.mrb[0].mxu0
        %v404 = vpop.f32.mrb[0].mxu0
        %405 = vdwg.mxu0
        %v406 = vpack.c.bf16 %v401, %v401
        %407 = vmatprep.subr.bf16.mxu0 0
        %408 = vmatpush1.bf16.xpose.msra.mxu0 %v406
        %409 = vmatprep.subr.bf16.mxu0 0
        %410 = vmatpush1.bf16.xpose.msra.mxu0 0
        %411 = vmatprep.subr.bf16.mxu0 0
        %412 = vmatpush1.bf16.xpose.msra.mxu0 0
        %413 = vmatprep.subr.bf16.mxu0 0
        %414 = vmatpush1.bf16.xpose.msra.mxu0 0
        %415 = vmatprep.subr.bf16.mxu0 0
        %416 = vmatpush1.bf16.xpose.msra.mxu0 0
        %417 = vmatprep.subr.bf16.mxu0 0
        %418 = vmatpush1.bf16.xpose.msra.mxu0 0
        %419 = vmatprep.subr.bf16.mxu0 0
        %420 = vmatpush1.bf16.xpose.msra.mxu0 0
        %421 = vmatprep.subr.bf16.mxu0 0
        %422 = vmatpush1.bf16.xpose.msra.mxu0 0
        %423 = vmatprep.subr.bf16.mxu0 0
        %424 = vmatpush1.bf16.xpose.msra.mxu0 0
        %425 = vmatprep.subr.bf16.mxu0 0
        %426 = vmatpush1.bf16.xpose.msra.mxu0 0
        %427 = vmatprep.subr.bf16.mxu0 0
        %428 = vmatpush1.bf16.xpose.msra.mxu0 0
        %429 = vmatprep.subr.bf16.mxu0 0
        %430 = vmatpush1.bf16.xpose.msra.mxu0 0
        %431 = vmatprep.subr.bf16.mxu0 0
        %432 = vmatpush1.bf16.xpose.msra.mxu0 0
        %433 = vmatprep.subr.bf16.mxu0 0
        %434 = vmatpush1.bf16.xpose.msra.mxu0 0
        %435 = vmatprep.subr.bf16.mxu0 0
        %436 = vmatpush1.bf16.xpose.msra.mxu0 0
        %437 = vmatprep.subr.bf16.mxu0 0
        %438 = vmatpush1.bf16.xpose.msra.mxu0 0
        %439 = vmatprep.mubr.bf16.mxu0 0
        %440 = vmatmul.mubr.bf16.gmra.mrb[0].mxu0 %v406
        %v441 = vpop.f32.mrb[0].mxu0
        %v442 = vadd.f32 0.0, %v441
        %v443 = vpop.f32.mrb[0].mxu0
        %v444 = vpop.f32.mrb[0].mxu0
        %v445 = vpop.f32.mrb[0].mxu0
        %446 = vdwg.mxu0
        %v447 = vmul.f32 %v442, 0.4472136
        %v448 = vld [vmem:[%s3] sm:$0xff]
        %v449 = vadd.f32 %v447, %v448
        %vm450 = vcmask 64512
        %v451 = vsel %vm450, %v449, -inf
        %452 = vmax.xlane.f32.xlu0 %v451
        %v453 = vpop.xlane.xlu0 %452
        %v454 = vsub.f32 %v449, %v453
        %v455 = vmul.f32 %v454, 1.442695
        %v456 = vpow.pop %v455
        %v457 = vsel %vm450, %v456, 0.0
        %458 = vadd.xlane.f32.xlu0 %v457
        %v459 = vpop.xlane.xlu0 %458
        %v460 = vrcp.pop %v459
        %v461 = vmul.f32 %v456, %v460
        %v462 = vpack.c.bf16 %v461, %v461
        %v464 = vsel %vm450, %v462, 0
        %vm466 = vcmask 1043456
        %v468 = vsel %vm466, %v406, 0
        %470 = vmatprep.subr.bf16.mxu0 0
        %471 = vmatpush1.bf16.msra.mxu0 %v468
        %472 = vmatprep.subr.bf16.mxu0 0
        %473 = vmatpush1.bf16.msra.mxu0 0
        %474 = vmatprep.subr.bf16.mxu0 0
        %475 = vmatpush1.bf16.msra.mxu0 0
        %476 = vmatprep.subr.bf16.mxu0 0
        %477 = vmatpush1.bf16.msra.mxu0 0
        %478 = vmatprep.subr.bf16.mxu0 0
        %479 = vmatpush1.bf16.msra.mxu0 0
        %480 = vmatprep.subr.bf16.mxu0 0
        %481 = vmatpush1.bf16.msra.mxu0 0
        %482 = vmatprep.subr.bf16.mxu0 0
        %483 = vmatpush1.bf16.msra.mxu0 0
        %484 = vmatprep.subr.bf16.mxu0 0
        %485 = vmatpush1.bf16.msra.mxu0 0
        %486 = vmatprep.subr.bf16.mxu0 0
        %487 = vmatpush1.bf16.msra.mxu0 0
        %488 = vmatprep.subr.bf16.mxu0 0
        %489 = vmatpush1.bf16.msra.mxu0 0
        %490 = vmatprep.subr.bf16.mxu0 0
        %491 = vmatpush1.bf16.msra.mxu0 0
        %492 = vmatprep.subr.bf16.mxu0 0
        %493 = vmatpush1.bf16.msra.mxu0 0
        %494 = vmatprep.subr.bf16.mxu0 0
        %495 = vmatpush1.bf16.msra.mxu0 0
        %496 = vmatprep.subr.bf16.mxu0 0
        %497 = vmatpush1.bf16.msra.mxu0 0
        %498 = vmatprep.subr.bf16.mxu0 0
        %499 = vmatpush1.bf16.msra.mxu0 0
        %500 = vmatprep.subr.bf16.mxu0 0
        %501 = vmatpush1.bf16.msra.mxu0 0
        %502 = vmatprep.mubr.bf16.mxu0 0
        %503 = vmatmul.mubr.bf16.gmra.mrb[0].mxu0 %v464
        %v504 = vpop.f32.mrb[0].mxu0
        %v505 = vadd.f32 0.0, %v504
        %v506 = vpop.f32.mrb[0].mxu0
        %v507 = vpop.f32.mrb[0].mxu0
        %v508 = vpop.f32.mrb[0].mxu0
        %509 = vdwg.mxu0
        %v510 = vpack.c.bf16 %v505, %v505
        %v511 = vlaneseq
        %v512 = vshrl.u32 %v511, 7
        %v513 = vsub.s32 0, %v512
        %v514 = vrot.slane %v279, %v513
        %v531 = vunpack.c.l.b16 %v230
        %v532 = vunpack.c.l.b16 %v231
        %v533 = vunpack.c.l.b16 %v232
        %v534 = vunpack.c.l.b16 %v233
        %v535 = vunpack.c.l.b16 %v234
        %v536 = vunpack.c.l.b16 %v235
        %v537 = vunpack.c.l.b16 %v236
        %v538 = vunpack.c.l.b16 %v237
        %v539 = vunpack.c.l.b16 %v238
        %v540 = vunpack.c.l.b16 %v239
        %v541 = vunpack.c.l.b16 %v240
        %v542 = vunpack.c.l.b16 %v241
        %v543 = vunpack.c.l.b16 %v242
        %v544 = vunpack.c.l.b16 %v243
        %v545 = vunpack.c.l.b16 %v244
        %v546 = vunpack.c.l.b16 %v245
        %v547 = vpack.c.b16 %v532, %v531
        %v548 = vpack.c.b16 %v534, %v533
        %v549 = vpack.c.b16 %v536, %v535
        %v550 = vpack.c.b16 %v538, %v537
        %v551 = vpack.c.b16 %v540, %v539
        %v552 = vpack.c.b16 %v542, %v541
        %v553 = vpack.c.b16 %v544, %v543
        %v554 = vpack.c.b16 %v546, %v545
        %563 = vmatprep.subr.bf16.mxu0 0
        %564 = vmatpush1.bf16.msra.mxu0 %v547
        %565 = vmatprep.subr.bf16.mxu0 0
        %566 = vmatpush1.bf16.msra.mxu0 %v548
        %567 = vmatprep.subr.bf16.mxu0 0
        %568 = vmatpush1.bf16.msra.mxu0 %v549
        %569 = vmatprep.subr.bf16.mxu0 0
        %570 = vmatpush1.bf16.msra.mxu0 %v550
        %571 = vmatprep.subr.bf16.mxu0 0
        %572 = vmatpush1.bf16.msra.mxu0 %v551
        %573 = vmatprep.subr.bf16.mxu0 0
        %574 = vmatpush1.bf16.msra.mxu0 %v552
        %575 = vmatprep.subr.bf16.mxu0 0
        %576 = vmatpush1.bf16.msra.mxu0 %v553
        %577 = vmatprep.subr.bf16.mxu0 0
        %578 = vmatpush1.bf16.msra.mxu0 %v554
        %579 = vmatprep.subr.bf16.mxu0 0
        %580 = vmatpush1.bf16.msra.mxu0 0
        %581 = vmatprep.subr.bf16.mxu0 0
        %582 = vmatpush1.bf16.msra.mxu0 0
        %583 = vmatprep.subr.bf16.mxu0 0
        %584 = vmatpush1.bf16.msra.mxu0 0
        %585 = vmatprep.subr.bf16.mxu0 0
        %586 = vmatpush1.bf16.msra.mxu0 0
        %587 = vmatprep.subr.bf16.mxu0 0
        %588 = vmatpush1.bf16.msra.mxu0 0
        %589 = vmatprep.subr.bf16.mxu0 0
        %590 = vmatpush1.bf16.msra.mxu0 0
        %591 = vmatprep.subr.bf16.mxu0 0
        %592 = vmatpush1.bf16.msra.mxu0 0
        %593 = vmatprep.subr.bf16.mxu0 0
        %594 = vmatpush1.bf16.msra.mxu0 0
        %595 = vmatprep.mubr.bf16.mxu0 0
        %596 = vmatmul.mubr.bf16.gmra.mrb[0].mxu0 %v510
        %v597 = vpop.f32.mrb[0].mxu0
        %v598 = vadd.f32 %v514, %v597
        %v599 = vpop.f32.mrb[0].mxu0
        %v600 = vpop.f32.mrb[0].mxu0
        %v601 = vpop.f32.mrb[0].mxu0
        %602 = vdwg.mxu0
        %v603 = vadd.f32 %v213, %v598
        %604 = vadd.xlane.f32.xlu0 %v603
        %v605 = vpop.xlane.xlu0 %604
        %v606 = vmul.f32 %v605, 0.2
        %v607 = vsub.f32 %v603, %v606
        %v608 = vsel %vm294, %v607, 0.0
        %v609 = vmul.f32 %v608, %v608
        %610 = vadd.xlane.f32.xlu0 %v609
        %v611 = vpop.xlane.xlu0 %610
        %v612 = vmul.f32 %v611, 0.2
        %v613 = vadd.f32 %v612, 1e-05
        %v614 = vrsqrt.pop %v613
        %v615 = vmul.f32 %v608, %v614
        %v616 = vlaneseq
        %v617 = vshrl.u32 %v616, 7
        %v618 = vsub.s32 0, %v617
        %v619 = vrot.slane %v282, %v618
        %v620 = vmul.f32 %v615, %v619
        %v621 = vlaneseq
        %v622 = vshrl.u32 %v621, 7
        %v623 = vsub.s32 0, %v622
        %v624 = vrot.slane %v283, %v623
        %v625 = vadd.f32 %v620, %v624
        %v626 = vpack.c.bf16 %v625, %v625
        %v627 = vlaneseq
        %v628 = vshrl.u32 %v627, 7
        %v629 = vsub.s32 0, %v628
        %v630 = vrot.slane %v284, %v629
        %v647 = vunpack.c.l.b16 %v246
        %v648 = vunpack.c.l.b16 %v247
        %v649 = vunpack.c.l.b16 %v248
        %v650 = vunpack.c.l.b16 %v249
        %v651 = vunpack.c.l.b16 %v250
        %v652 = vunpack.c.l.b16 %v251
        %v653 = vunpack.c.l.b16 %v252
        %v654 = vunpack.c.l.b16 %v253
        %v655 = vunpack.c.l.b16 %v254
        %v656 = vunpack.c.l.b16 %v255
        %v657 = vunpack.c.l.b16 %v256
        %v658 = vunpack.c.l.b16 %v257
        %v659 = vunpack.c.l.b16 %v258
        %v660 = vunpack.c.l.b16 %v259
        %v661 = vunpack.c.l.b16 %v260
        %v662 = vunpack.c.l.b16 %v261
        %v663 = vpack.c.b16 %v648, %v647
        %v664 = vpack.c.b16 %v650, %v649
        %v665 = vpack.c.b16 %v652, %v651
        %v666 = vpack.c.b16 %v654, %v653
        %v667 = vpack.c.b16 %v656, %v655
        %v668 = vpack.c.b16 %v658, %v657
        %v669 = vpack.c.b16 %v660, %v659
        %v670 = vpack.c.b16 %v662, %v661
        %679 = vmatprep.subr.bf16.mxu0 0
        %680 = vmatpush1.bf16.msra.mxu0 %v663
        %681 = vmatprep.subr.bf16.mxu0 0
        %682 = vmatpush1.bf16.msra.mxu0 %v664
        %683 = vmatprep.subr.bf16.mxu0 0
        %684 = vmatpush1.bf16.msra.mxu0 %v665
        %685 = vmatprep.subr.bf16.mxu0 0
        %686 = vmatpush1.bf16.msra.mxu0 %v666
        %687 = vmatprep.subr.bf16.mxu0 0
        %688 = vmatpush1.bf16.msra.mxu0 %v667
        %689 = vmatprep.subr.bf16.mxu0 0
        %690 = vmatpush1.bf16.msra.mxu0 %v668
        %691 = vmatprep.subr.bf16.mxu0 0
        %692 = vmatpush1.bf16.msra.mxu0 %v669
        %693 = vmatprep.subr.bf16.mxu0 0
        %694 = vmatpush1.bf16.msra.mxu0 %v670
        %695 = vmatprep.subr.bf16.mxu0 0
        %696 = vmatpush1.bf16.msra.mxu0 0
        %697 = vmatprep.subr.bf16.mxu0 0
        %698 = vmatpush1.bf16.msra.mxu0 0
        %699 = vmatprep.subr.bf16.mxu0 0
        %700 = vmatpush1.bf16.msra.mxu0 0
        %701 = vmatprep.subr.bf16.mxu0 0
        %702 = vmatpush1.bf16.msra.mxu0 0
        %703 = vmatprep.subr.bf16.mxu0 0
        %704 = vmatpush1.bf16.msra.mxu0 0
        %705 = vmatprep.subr.bf16.mxu0 0
        %706 = vmatpush1.bf16.msra.mxu0 0
        %707 = vmatprep.subr.bf16.mxu0 0
        %708 = vmatpush1.bf16.msra.mxu0 0
        %709 = vmatprep.subr.bf16.mxu0 0
        %710 = vmatpush1.bf16.msra.mxu0 0
        %711 = vmatprep.mubr.bf16.mxu0 0
        %712 = vmatmul.mubr.bf16.gmra.mrb[0].mxu0 %v626
        %v713 = vpop.f32.mrb[0].mxu0
        %v714 = vadd.f32 %v630, %v713
        %v715 = vpop.f32.mrb[0].mxu0
        %v716 = vpop.f32.mrb[0].mxu0
        %v717 = vpop.f32.mrb[0].mxu0
        %718 = vdwg.mxu0
        %v719 = vmax.f32 %v714, 0.0
        %v720 = vpack.c.bf16 %v719, %v719
        %v721 = vlaneseq
        %v722 = vshrl.u32 %v721, 7
        %v723 = vsub.s32 0, %v722
        %v724 = vrot.slane %v285, %v723
        %v741 = vunpack.c.l.b16 %v262
        %v742 = vunpack.c.l.b16 %v263
        %v743 = vunpack.c.l.b16 %v264
        %v744 = vunpack.c.l.b16 %v265
        %v745 = vunpack.c.l.b16 %v266
        %v746 = vunpack.c.l.b16 %v267
        %v747 = vunpack.c.l.b16 %v268
        %v748 = vunpack.c.l.b16 %v269
        %v749 = vunpack.c.l.b16 %v270
        %v750 = vunpack.c.l.b16 %v271
        %v751 = vunpack.c.l.b16 %v272
        %v752 = vunpack.c.l.b16 %v273
        %v753 = vunpack.c.l.b16 %v274
        %v754 = vunpack.c.l.b16 %v275
        %v755 = vunpack.c.l.b16 %v276
        %v756 = vunpack.c.l.b16 %v277
        %v757 = vpack.c.b16 %v742, %v741
        %v758 = vpack.c.b16 %v744, %v743
        %v759 = vpack.c.b16 %v746, %v745
        %v760 = vpack.c.b16 %v748, %v747
        %v761 = vpack.c.b16 %v750, %v749
        %v762 = vpack.c.b16 %v752, %v751
        %v763 = vpack.c.b16 %v754, %v753
        %v764 = vpack.c.b16 %v756, %v755
        %773 = vmatprep.subr.bf16.mxu0 0
        %774 = vmatpush1.bf16.msra.mxu0 %v757
        %775 = vmatprep.subr.bf16.mxu0 0
        %776 = vmatpush1.bf16.msra.mxu0 %v758
        %777 = vmatprep.subr.bf16.mxu0 0
        %778 = vmatpush1.bf16.msra.mxu0 %v759
        %779 = vmatprep.subr.bf16.mxu0 0
        %780 = vmatpush1.bf16.msra.mxu0 %v760
        %781 = vmatprep.subr.bf16.mxu0 0
        %782 = vmatpush1.bf16.msra.mxu0 %v761
        %783 = vmatprep.subr.bf16.mxu0 0
        %784 = vmatpush1.bf16.msra.mxu0 %v762
        %785 = vmatprep.subr.bf16.mxu0 0
        %786 = vmatpush1.bf16.msra.mxu0 %v763
        %787 = vmatprep.subr.bf16.mxu0 0
        %788 = vmatpush1.bf16.msra.mxu0 %v764
        %789 = vmatprep.subr.bf16.mxu0 0
        %790 = vmatpush1.bf16.msra.mxu0 0
        %791 = vmatprep.subr.bf16.mxu0 0
        %792 = vmatpush1.bf16.msra.mxu0 0
        %793 = vmatprep.subr.bf16.mxu0 0
        %794 = vmatpush1.bf16.msra.mxu0 0
        %795 = vmatprep.subr.bf16.mxu0 0
        %796 = vmatpush1.bf16.msra.mxu0 0
        %797 = vmatprep.subr.bf16.mxu0 0
        %798 = vmatpush1.bf16.msra.mxu0 0
        %799 = vmatprep.subr.bf16.mxu0 0
        %800 = vmatpush1.bf16.msra.mxu0 0
        %801 = vmatprep.subr.bf16.mxu0 0
        %802 = vmatpush1.bf16.msra.mxu0 0
        %803 = vmatprep.subr.bf16.mxu0 0
        %804 = vmatpush1.bf16.msra.mxu0 0
        %805 = vmatprep.mubr.bf16.mxu0 0
        %806 = vmatmul.mubr.bf16.gmra.mrb[0].mxu0 %v720
        %v807 = vpop.f32.mrb[0].mxu0
        %v808 = vadd.f32 %v724, %v807
        %v809 = vpop.f32.mrb[0].mxu0
        %v810 = vpop.f32.mrb[0].mxu0
        %v811 = vpop.f32.mrb[0].mxu0
        %812 = vdwg.mxu0
        %v813 = vadd.f32 %v603, %v808
        %814 = vst.msk [vmem:[%s207] sm:$0xff] %vm211, %v813
        %p815 = scmp.lt.s32.totalorder %s16, 1
        %s816 = scalar_select %p815, %s16, 1
        %s817 = smul.addr %s816, 8
        %s818 = scalar_lea.vmem %s4, %s817
        // Predicated region
        $region41: #{tpu_custom_call.1} parent=35 // pred_check
          %p819 = pneg %p123
        $region42: #{tpu_custom_call.1} parent=35 // pred_check_branch
          %821 = sbr.rel (%p819) target = $region44
        $region43: #{tpu_custom_call.1} parent=35 // pred_region
          _
        $region44: #{tpu_custom_call.1} parent=35 // pred_fallthru
          _
      $region36: #{tpu_custom_call.1} parent=5 // pred_fallthru
        _
      %p822 = scmp.le.s32.totalorder 2, %s11
      // Predicated region
      $region45: #{tpu_custom_call.1} parent=5 // pred_check
        %p823 = pneg %p822
      $region46: #{tpu_custom_call.1} parent=5 // pred_check_branch
        %825 = sbr.rel (%p823) target = $region48
      $region47: #{tpu_custom_call.1} parent=5 // pred_region
        %s826 = ssub.s32 %s11, 2
        // Predicated region
        $region49: #{tpu_custom_call.1} parent=47 // pred_check
          %p827 = pneg %p129
        $region50: #{tpu_custom_call.1} parent=47 // pred_check_branch
          %829 = sbr.rel (%p827) target = $region52
        $region51: #{tpu_custom_call.1} parent=47 // pred_region
          %p830 = scmp.lt.s32.totalorder %s17, 1
          %s831 = scalar_select %p830, %s17, 1
          %s832 = smul.addr %s831, 8
          %s833 = scalar_lea.vmem %s4, %s832
        $region52: #{tpu_custom_call.1} parent=47 // pred_fallthru
          _
      $region48: #{tpu_custom_call.1} parent=5 // pred_fallthru
        _
    $region6: #{tpu_custom_call.1} parent=1 // loop_footer
      %s15 = sadd.s32 1, %s11
    $region7: #{tpu_custom_call.1} parent=1 // loop_footer_branch
      %10 = sbr.rel target = $region3
    $region8: #{tpu_custom_call.1} parent=1 // loop_exit
      _
    %834 = vsyncpa [#allocation4], 1
    %s835 = scalar_lea.sflag [#allocation4], 1
    %836 = vsyncpa %s835, 1

</llo_original>
